<compile_context>
chip_gen: v7x
topology: tpu7x:2x2x1
jax: 0.10.0
libtpu: 0.0.40
codegen_flags: <defaults>
</compile_context>

<pallas_src>
import jax
import jax.numpy as jnp
from jax.experimental import pallas as pl
from jax.experimental.pallas import tpu as pltpu

BN_EPS = 1e-5


def _classifier_kernel(cls_ref, scale_ref, shift_ref, des_ref, inv_ref, w_head_ref,
                       ita_ref, iti_ref, itc_ref, feat_f_ref, feat_ref, logits_ref):
    x = cls_ref[...]            # (TB, D) float32  -- CLS rows
    s = scale_ref[...]          # (5, D) composed scales [a, i, c, f, g]
    t = shift_ref[...]          # (5, D) composed shifts [a, i, c, f, g]
    D = x.shape[1]

    # Every BN chain is a single affine of cls (folded in the wrapper).
    a    = x * s[0:1, :] + t[0:1, :]   # bn_a(cls)
    i    = x * s[1:2, :] + t[1:2, :]   # bn_i(bn_a(cls))
    c    = x * s[2:3, :] + t[2:3, :]   # bn_c(cls)
    f    = x * s[3:4, :] + t[3:4, :]   # bn_f(bn_i(bn_a(cls)))
    feat = x * s[4:5, :] + t[4:5, :]   # bn_g(feat_f)

    # Fused concatenations: first D lanes = BN result, tail = word embedding.
    ita_ref[:, :D] = a
    ita_ref[:, D:] = des_ref[...]
    iti_ref[:, :D] = i
    iti_ref[:, D:] = inv_ref[...]
    itc_ref[:, :D] = c
    itc_ref[:, D:] = des_ref[...]

    feat_f_ref[...] = f
    feat_ref[...] = feat

    # head: Linear(D -> C, bias=False); weight passed pre-transposed and
    # lane-padded to (D, C_pad) so the store is lane-dense.
    logits_ref[...] = jnp.dot(feat, w_head_ref[...],
                              preferred_element_type=jnp.float32)


def transformer_classifier_forward(features, word_embed_des, word_embed_inv,
                                   bn_gamma, bn_beta, bn_mean, bn_var, head_w):
    """features: (B, N, D); word_embed_*: (B, T); head_w: (num_classes, D).

    bn_* are (5, D) packed as [bn_a, bn_i, bn_c, bn_f, bn_g].
    Returns ([feat_ita, feat_iti, feat_itc, feat_f], feat, [logits_g]).
    """
    B, N, D = features.shape
    C = head_w.shape[0]
    Temb = word_embed_des.shape[1]
    f32 = jnp.float32

    # ---- Fold BatchNorm (inference) into affine pairs and compose the chains.
    sc = bn_gamma.astype(f32) * jax.lax.rsqrt(bn_var.astype(f32) + BN_EPS)  # (5, D)
    sh = bn_beta.astype(f32) - bn_mean.astype(f32) * sc                     # (5, D)
    sc_a, sc_i, sc_c, sc_f, sc_g = sc[0], sc[1], sc[2], sc[3], sc[4]
    sh_a, sh_i, sh_c, sh_f, sh_g = sh[0], sh[1], sh[2], sh[3], sh[4]
    S_a, T_a = sc_a, sh_a                                  # a    = bn_a(cls)
    S_i, T_i = S_a * sc_i, T_a * sc_i + sh_i               # i    = bn_i(a)
    S_c, T_c = sc_c, sh_c                                  # c    = bn_c(cls)
    S_f, T_f = S_i * sc_f, T_i * sc_f + sh_f               # f    = bn_f(i)
    S_g, T_g = S_f * sc_g, T_f * sc_g + sh_g               # feat = bn_g(f)
    S = jnp.stack([S_a, S_i, S_c, S_f, S_g])               # (5, D)
    T = jnp.stack([T_a, T_i, T_c, T_f, T_g])               # (5, D)

    # ---- Lane-pad the head so the logits store is lane-dense (C=16 -> 128).
    C_pad = max(128, ((C + 127) // 128) * 128)
    w_head_t = jnp.zeros((D, C_pad), f32).at[:, :C].set(head_w.T.astype(f32))

    # ---- CLS slice fused into the input DMA: view features as (B, N*D);
    # the (TB, D) block at column-block 0 is exactly features[:, 0, :].
    feats2d = features.astype(f32).reshape(B, N * D)

    # ---- Batch tiling: TB multiple of 8, capped at 512 (v7x 64 MiB VMEM with
    # double-buffered in/out blocks); TB == B fallback keeps layout legal.
    TB = B
    for cand in (512, 256, 128, 64, 32, 16, 8):
        if B % cand == 0:
            TB = cand
            break
    grid = (B // TB,)
    DT = D + Temb

    row_spec = lambda w: pl.BlockSpec((TB, w), lambda i: (i, 0))
    fix_spec = lambda r, w: pl.BlockSpec((r, w), lambda i: (0, 0))

    outs = pl.pallas_call(
        _classifier_kernel,
        grid=grid,
        in_specs=[
            row_spec(D),            # CLS rows of (B, N*D)
            fix_spec(5, D),         # composed scales
            fix_spec(5, D),         # composed shifts
            row_spec(Temb),         # word_embed_des
            row_spec(Temb),         # word_embed_inv
            fix_spec(D, C_pad),     # padded head weight (D, C_pad)
        ],
        out_specs=(
            row_spec(DT),           # feat_ita
            row_spec(DT),           # feat_iti
            row_spec(DT),           # feat_itc
            row_spec(D),            # feat_f
            row_spec(D),            # feat
            row_spec(C_pad),        # logits (lane-padded)
        ),
        out_shape=(
            jax.ShapeDtypeStruct((B, DT), f32),
            jax.ShapeDtypeStruct((B, DT), f32),
            jax.ShapeDtypeStruct((B, DT), f32),
            jax.ShapeDtypeStruct((B, D), f32),
            jax.ShapeDtypeStruct((B, D), f32),
            jax.ShapeDtypeStruct((B, C_pad), f32),
        ),
        compiler_params=pltpu.CompilerParams(
            dimension_semantics=("parallel",)),
    )(feats2d, S, T, word_embed_des.astype(f32), word_embed_inv.astype(f32),
      w_head_t)

    feat_ita, feat_iti, feat_itc, feat_f, feat, logits_pad = outs
    logits_g = logits_pad[:, :C]
    return [feat_ita, feat_iti, feat_itc, feat_f], feat, [logits_g]


def _reference(features, word_embed_des, word_embed_inv,
               bn_gamma, bn_beta, bn_mean, bn_var, head_w):
    cls = features[:, 0, :].astype(jnp.float32)

    def bn(v, idx):
        inv = jax.lax.rsqrt(bn_var[idx] + BN_EPS)
        return (v - bn_mean[idx]) * (bn_gamma[idx] * inv) + bn_beta[idx]

    a = bn(cls, 0); i = bn(a, 1); c = bn(cls, 2); f = bn(i, 3); feat = bn(f, 4)
    logits = feat @ head_w.T
    return ([jnp.concatenate([a, word_embed_des], 1),
             jnp.concatenate([i, word_embed_inv], 1),
             jnp.concatenate([c, word_embed_des], 1),
             f], feat, [logits])


if __name__ == "__main__":
    # Small shapes consistent with the forward: B tokens of a ViT, dim D,
    # num_classes C, CLIP-text embedding width Temb.
    B, N, D, C, Temb = 8, 4, 128, 16, 64

    key = jax.random.PRNGKey(0)
    k_feat, k_des, k_inv, k_head = jax.random.split(key, 4)

    features = jax.random.normal(k_feat, (B, N, D), dtype=jnp.float32)
    word_embed_des = jax.random.normal(k_des, (B, Temb), dtype=jnp.float32)
    word_embed_inv = jax.random.normal(k_inv, (B, Temb), dtype=jnp.float32)

    # Parameters, initialized exactly as the module's __init__ would:
    # 5 BatchNorm1d(dim) layers [bn_a, bn_i, bn_c, bn_f, bn_g]:
    #   _init_kaiming -> weight=1, bias=0; default running_mean=0, running_var=1.
    bn_gamma = jnp.ones((5, D), jnp.float32)
    bn_beta = jnp.zeros((5, D), jnp.float32)
    bn_mean = jnp.zeros((5, D), jnp.float32)
    bn_var = jnp.ones((5, D), jnp.float32)
    # head: Linear(dim, num_classes, bias=False), trunc_normal_(std=0.001).
    head_w = 0.001 * jax.random.truncated_normal(k_head, -2.0, 2.0, (C, D),
                                                 dtype=jnp.float32)

    feats_out, feat, logits = transformer_classifier_forward(
        features, word_embed_des, word_embed_inv,
        bn_gamma, bn_beta, bn_mean, bn_var, head_w)
    jax.block_until_ready((feats_out, feat, logits))

    # Sanity-check against a pure-JAX reference.
    ref_feats, ref_feat, ref_logits = _reference(
        features, word_embed_des, word_embed_inv,
        bn_gamma, bn_beta, bn_mean, bn_var, head_w)
    for got, want in zip(feats_out + [feat] + logits,
                         ref_feats + [ref_feat] + ref_logits):
        assert got.shape == want.shape
        assert jnp.allclose(got, want, atol=1e-5, rtol=1e-5)

    print("KERNEL_OK")
</pallas_src>

<mosaic_0001>
module attributes {stable_mosaic.version = 11 : i64} {
  func.func @_classifier_kernel(%arg0: i32, %arg1: memref<8x128xf32, #tpu.memory_space<vmem>>, %arg2: memref<5x128xf32, #tpu.memory_space<vmem>>, %arg3: memref<5x128xf32, #tpu.memory_space<vmem>>, %arg4: memref<8x64xf32, #tpu.memory_space<vmem>>, %arg5: memref<8x64xf32, #tpu.memory_space<vmem>>, %arg6: memref<128x128xf32, #tpu.memory_space<vmem>>, %arg7: memref<8x192xf32, #tpu.memory_space<vmem>>, %arg8: memref<8x192xf32, #tpu.memory_space<vmem>>, %arg9: memref<8x192xf32, #tpu.memory_space<vmem>>, %arg10: memref<8x128xf32, #tpu.memory_space<vmem>>, %arg11: memref<8x128xf32, #tpu.memory_space<vmem>>, %arg12: memref<8x128xf32, #tpu.memory_space<vmem>>) attributes {dimension_semantics = [#tpu.dimension_semantics<parallel>], iteration_bounds = array<i64: 1>, scalar_prefetch = 0 : i64, scratch_operands = 0 : i64, tpu.core_type = #tpu.core_type<tc>, window_params = [{transform_indices = @transform_0, window_bounds = array<i64: 8, 128>}, {pipeline_mode = #tpu.pipeline_mode<synchronous>, transform_indices = @transform_1, window_bounds = array<i64: 5, 128>}, {pipeline_mode = #tpu.pipeline_mode<synchronous>, transform_indices = @transform_2, window_bounds = array<i64: 5, 128>}, {transform_indices = @transform_3, window_bounds = array<i64: 8, 64>}, {transform_indices = @transform_4, window_bounds = array<i64: 8, 64>}, {pipeline_mode = #tpu.pipeline_mode<synchronous>, transform_indices = @transform_5, window_bounds = array<i64: 128, 128>}, {transform_indices = @transform_6, window_bounds = array<i64: 8, 192>}, {transform_indices = @transform_7, window_bounds = array<i64: 8, 192>}, {transform_indices = @transform_8, window_bounds = array<i64: 8, 192>}, {transform_indices = @transform_9, window_bounds = array<i64: 8, 128>}, {transform_indices = @transform_10, window_bounds = array<i64: 8, 128>}, {transform_indices = @transform_11, window_bounds = array<i64: 8, 128>}]} {
    %c0 = arith.constant 0 : index
    %c0_0 = arith.constant 0 : index
    %0 = vector.load %arg1[%c0, %c0_0] : memref<8x128xf32, #tpu.memory_space<vmem>>, vector<8x128xf32>
    %c0_1 = arith.constant 0 : index
    %c0_2 = arith.constant 0 : index
    %1 = vector.load %arg2[%c0_1, %c0_2] : memref<5x128xf32, #tpu.memory_space<vmem>>, vector<5x128xf32>
    %c0_3 = arith.constant 0 : index
    %c0_4 = arith.constant 0 : index
    %2 = vector.load %arg3[%c0_3, %c0_4] : memref<5x128xf32, #tpu.memory_space<vmem>>, vector<5x128xf32>
    %3 = vector.extract_strided_slice %1 {offsets = [0, 0], sizes = [1, 128], strides = [1, 1]} : vector<5x128xf32> to vector<1x128xf32>
    %4 = vector.broadcast %3 : vector<1x128xf32> to vector<8x128xf32>
    %5 = arith.mulf %0, %4 : vector<8x128xf32>
    %6 = vector.extract_strided_slice %2 {offsets = [0, 0], sizes = [1, 128], strides = [1, 1]} : vector<5x128xf32> to vector<1x128xf32>
    %7 = vector.broadcast %6 : vector<1x128xf32> to vector<8x128xf32>
    %8 = arith.addf %5, %7 : vector<8x128xf32>
    %9 = vector.extract_strided_slice %1 {offsets = [1, 0], sizes = [1, 128], strides = [1, 1]} : vector<5x128xf32> to vector<1x128xf32>
    %10 = vector.broadcast %9 : vector<1x128xf32> to vector<8x128xf32>
    %11 = arith.mulf %0, %10 : vector<8x128xf32>
    %12 = vector.extract_strided_slice %2 {offsets = [1, 0], sizes = [1, 128], strides = [1, 1]} : vector<5x128xf32> to vector<1x128xf32>
    %13 = vector.broadcast %12 : vector<1x128xf32> to vector<8x128xf32>
    %14 = arith.addf %11, %13 : vector<8x128xf32>
    %15 = vector.extract_strided_slice %1 {offsets = [2, 0], sizes = [1, 128], strides = [1, 1]} : vector<5x128xf32> to vector<1x128xf32>
    %16 = vector.broadcast %15 : vector<1x128xf32> to vector<8x128xf32>
    %17 = arith.mulf %0, %16 : vector<8x128xf32>
    %18 = vector.extract_strided_slice %2 {offsets = [2, 0], sizes = [1, 128], strides = [1, 1]} : vector<5x128xf32> to vector<1x128xf32>
    %19 = vector.broadcast %18 : vector<1x128xf32> to vector<8x128xf32>
    %20 = arith.addf %17, %19 : vector<8x128xf32>
    %21 = vector.extract_strided_slice %1 {offsets = [3, 0], sizes = [1, 128], strides = [1, 1]} : vector<5x128xf32> to vector<1x128xf32>
    %22 = vector.broadcast %21 : vector<1x128xf32> to vector<8x128xf32>
    %23 = arith.mulf %0, %22 : vector<8x128xf32>
    %24 = vector.extract_strided_slice %2 {offsets = [3, 0], sizes = [1, 128], strides = [1, 1]} : vector<5x128xf32> to vector<1x128xf32>
    %25 = vector.broadcast %24 : vector<1x128xf32> to vector<8x128xf32>
    %26 = arith.addf %23, %25 : vector<8x128xf32>
    %27 = vector.extract_strided_slice %1 {offsets = [4, 0], sizes = [1, 128], strides = [1, 1]} : vector<5x128xf32> to vector<1x128xf32>
    %28 = vector.broadcast %27 : vector<1x128xf32> to vector<8x128xf32>
    %29 = arith.mulf %0, %28 : vector<8x128xf32>
    %30 = vector.extract_strided_slice %2 {offsets = [4, 0], sizes = [1, 128], strides = [1, 1]} : vector<5x128xf32> to vector<1x128xf32>
    %31 = vector.broadcast %30 : vector<1x128xf32> to vector<8x128xf32>
    %32 = arith.addf %29, %31 : vector<8x128xf32>
    %c0_5 = arith.constant 0 : index
    %c0_6 = arith.constant 0 : index
    %33 = vector.load %arg7[%c0_5, %c0_6] : memref<8x192xf32, #tpu.memory_space<vmem>>, vector<8x128xf32>
    tpu.vector_store %arg7[%c0_5, %c0_6], %8 {strides = array<i32>} : memref<8x192xf32, #tpu.memory_space<vmem>>, vector<8x128xf32>,
    %c0_7 = arith.constant 0 : index
    %c0_8 = arith.constant 0 : index
    %34 = vector.load %arg4[%c0_7, %c0_8] : memref<8x64xf32, #tpu.memory_space<vmem>>, vector<8x64xf32>
    %c0_9 = arith.constant 0 : index
    %c128 = arith.constant 128 : index
    %35 = vector.load %arg7[%c0_9, %c128] : memref<8x192xf32, #tpu.memory_space<vmem>>, vector<8x64xf32>
    tpu.vector_store %arg7[%c0_9, %c128], %34 {strides = array<i32>} : memref<8x192xf32, #tpu.memory_space<vmem>>, vector<8x64xf32>,
    %c0_10 = arith.constant 0 : index
    %c0_11 = arith.constant 0 : index
    %36 = vector.load %arg8[%c0_10, %c0_11] : memref<8x192xf32, #tpu.memory_space<vmem>>, vector<8x128xf32>
    tpu.vector_store %arg8[%c0_10, %c0_11], %14 {strides = array<i32>} : memref<8x192xf32, #tpu.memory_space<vmem>>, vector<8x128xf32>,
    %c0_12 = arith.constant 0 : index
    %c0_13 = arith.constant 0 : index
    %37 = vector.load %arg5[%c0_12, %c0_13] : memref<8x64xf32, #tpu.memory_space<vmem>>, vector<8x64xf32>
    %c0_14 = arith.constant 0 : index
    %c128_15 = arith.constant 128 : index
    %38 = vector.load %arg8[%c0_14, %c128_15] : memref<8x192xf32, #tpu.memory_space<vmem>>, vector<8x64xf32>
    tpu.vector_store %arg8[%c0_14, %c128_15], %37 {strides = array<i32>} : memref<8x192xf32, #tpu.memory_space<vmem>>, vector<8x64xf32>,
    %c0_16 = arith.constant 0 : index
    %c0_17 = arith.constant 0 : index
    %39 = vector.load %arg9[%c0_16, %c0_17] : memref<8x192xf32, #tpu.memory_space<vmem>>, vector<8x128xf32>
    tpu.vector_store %arg9[%c0_16, %c0_17], %20 {strides = array<i32>} : memref<8x192xf32, #tpu.memory_space<vmem>>, vector<8x128xf32>,
    %c0_18 = arith.constant 0 : index
    %c0_19 = arith.constant 0 : index
    %40 = vector.load %arg4[%c0_18, %c0_19] : memref<8x64xf32, #tpu.memory_space<vmem>>, vector<8x64xf32>
    %c0_20 = arith.constant 0 : index
    %c128_21 = arith.constant 128 : index
    %41 = vector.load %arg9[%c0_20, %c128_21] : memref<8x192xf32, #tpu.memory_space<vmem>>, vector<8x64xf32>
    tpu.vector_store %arg9[%c0_20, %c128_21], %40 {strides = array<i32>} : memref<8x192xf32, #tpu.memory_space<vmem>>, vector<8x64xf32>,
    %c0_22 = arith.constant 0 : index
    %c0_23 = arith.constant 0 : index
    %42 = vector.load %arg10[%c0_22, %c0_23] : memref<8x128xf32, #tpu.memory_space<vmem>>, vector<8x128xf32>
    tpu.vector_store %arg10[%c0_22, %c0_23], %26 {strides = array<i32>} : memref<8x128xf32, #tpu.memory_space<vmem>>, vector<8x128xf32>,
    %c0_24 = arith.constant 0 : index
    %c0_25 = arith.constant 0 : index
    %43 = vector.load %arg11[%c0_24, %c0_25] : memref<8x128xf32, #tpu.memory_space<vmem>>, vector<8x128xf32>
    tpu.vector_store %arg11[%c0_24, %c0_25], %32 {strides = array<i32>} : memref<8x128xf32, #tpu.memory_space<vmem>>, vector<8x128xf32>,
    %c0_26 = arith.constant 0 : index
    %c0_27 = arith.constant 0 : index
    %44 = vector.load %arg6[%c0_26, %c0_27] : memref<128x128xf32, #tpu.memory_space<vmem>>, vector<128x128xf32>
    %cst = arith.constant dense<0.000000e+00> : vector<8x128xf32>
    %45 = tpu.matmul %32, %44, %cst {dimension_numbers = #tpu.dot_dimension_numbers<[1], [0], [0], [1], [0, 0, 1, 1], [], []>} : vector<8x128xf32>, vector<128x128xf32>, vector<8x128xf32> -> vector<8x128xf32>
    %c0_28 = arith.constant 0 : index
    %c0_29 = arith.constant 0 : index
    %46 = vector.load %arg12[%c0_28, %c0_29] : memref<8x128xf32, #tpu.memory_space<vmem>>, vector<8x128xf32>
    tpu.vector_store %arg12[%c0_28, %c0_29], %45 {strides = array<i32>} : memref<8x128xf32, #tpu.memory_space<vmem>>, vector<8x128xf32>,
    return
  }
  func.func @transform_0(%arg0: i32) -> (i32, i32) {
    %c0_i32 = arith.constant 0 : i32
    %c0_i32_0 = arith.constant 0 : i32
    return %arg0, %c0_i32 : i32, i32
  }
  func.func @transform_1(%arg0: i32) -> (i32, i32) {
    %c0_i32 = arith.constant 0 : i32
    %c0_i32_0 = arith.constant 0 : i32
    %c0_i32_1 = arith.constant 0 : i32
    return %c0_i32, %c0_i32_0 : i32, i32
  }
  func.func @transform_2(%arg0: i32) -> (i32, i32) {
    %c0_i32 = arith.constant 0 : i32
    %c0_i32_0 = arith.constant 0 : i32
    %c0_i32_1 = arith.constant 0 : i32
    return %c0_i32, %c0_i32_0 : i32, i32
  }
  func.func @transform_3(%arg0: i32) -> (i32, i32) {
    %c0_i32 = arith.constant 0 : i32
    %c0_i32_0 = arith.constant 0 : i32
    return %arg0, %c0_i32 : i32, i32
  }
  func.func @transform_4(%arg0: i32) -> (i32, i32) {
    %c0_i32 = arith.constant 0 : i32
    %c0_i32_0 = arith.constant 0 : i32
    return %arg0, %c0_i32 : i32, i32
  }
  func.func @transform_5(%arg0: i32) -> (i32, i32) {
    %c0_i32 = arith.constant 0 : i32
    %c0_i32_0 = arith.constant 0 : i32
    %c0_i32_1 = arith.constant 0 : i32
    return %c0_i32, %c0_i32_0 : i32, i32
  }
  func.func @transform_6(%arg0: i32) -> (i32, i32) {
    %c0_i32 = arith.constant 0 : i32
    %c0_i32_0 = arith.constant 0 : i32
    return %arg0, %c0_i32 : i32, i32
  }
  func.func @transform_7(%arg0: i32) -> (i32, i32) {
    %c0_i32 = arith.constant 0 : i32
    %c0_i32_0 = arith.constant 0 : i32
    return %arg0, %c0_i32 : i32, i32
  }
  func.func @transform_8(%arg0: i32) -> (i32, i32) {
    %c0_i32 = arith.constant 0 : i32
    %c0_i32_0 = arith.constant 0 : i32
    return %arg0, %c0_i32 : i32, i32
  }
  func.func @transform_9(%arg0: i32) -> (i32, i32) {
    %c0_i32 = arith.constant 0 : i32
    %c0_i32_0 = arith.constant 0 : i32
    return %arg0, %c0_i32 : i32, i32
  }
  func.func @transform_10(%arg0: i32) -> (i32, i32) {
    %c0_i32 = arith.constant 0 : i32
    %c0_i32_0 = arith.constant 0 : i32
    return %arg0, %c0_i32 : i32, i32
  }
  func.func @transform_11(%arg0: i32) -> (i32, i32) {
    %c0_i32 = arith.constant 0 : i32
    %c0_i32_0 = arith.constant 0 : i32
    return %arg0, %c0_i32 : i32, i32
  }
}

</mosaic_0001>

<llo_original>
// kernel: tpu_custom_call.1
$region0: #{tpu_custom_call.1}
  #allocation0 [shape = 'u32[]', space=smem, size = 0x4, offset = 0x4, fixed_abs, tag = 'smem constant byte address 0x4 - core index']
  #allocation1 [shape = 'u32[144,128]{1,0:T(1,128)}', space=vmem, size = 0x12000, scoped, tag = 'internal scratch']
  %s0 = inlined_call_operand.hbm [shape: f32[8,512], index: 0, kind: input, shape index: {}]
  %s1 = inlined_call_operand.hbm [shape: f32[5,128], index: 1, kind: input, shape index: {}]
  %s2 = inlined_call_operand.hbm [shape: f32[5,128], index: 2, kind: input, shape index: {}]
  %s3 = inlined_call_operand.vmem [shape: f32[8,64], index: 3, kind: input, shape index: {}]
  %s4 = inlined_call_operand.hbm [shape: f32[8,64], index: 4, kind: input, shape index: {}]
  %s5 = inlined_call_operand.hbm [shape: f32[128,128], index: 5, kind: input, shape index: {}]
  %s6 = inlined_call_operand.hbm [shape: f32[8,192], index: 6, kind: output, shape index: {0}]
  %s7 = inlined_call_operand.hbm [shape: f32[8,192], index: 7, kind: output, shape index: {1}]
  %s8 = inlined_call_operand.hbm [shape: f32[8,192], index: 8, kind: output, shape index: {2}]
  %s9 = inlined_call_operand.hbm [shape: f32[8,128], index: 9, kind: output, shape index: {3}]
  %s10 = inlined_call_operand.hbm [shape: f32[8,128], index: 10, kind: output, shape index: {4}]
  %s11 = inlined_call_operand.hbm [shape: f32[8,128], index: 11, kind: output, shape index: {5}]
  %12 = xla_tuple %s6, %s7, %s8, %s9, %s10, %s11
  %s13 = sld [smem:[#allocation0]]
  $region94: #{tpu_custom_call.1} parent=0
    _
  %s15 = ssub.s32 1, %s13
  %s16 = scalar_select 0, %s15, %s13
  $region1: #{tpu_custom_call.1} parent=0
    #allocation2 [shape = 'u8[4096]{0}', space=vmem, size = 0x1000, scoped, tag = 'input window, operand 0, single buffered']
    #allocation3 [shape = 's32[1]{0}', space=sflag, size = 0x4, scoped, tag = 'scoped memory for tpu_custom_call.1']
    #allocation4 [shape = 's32[1]{0}', space=sflag, size = 0x4, scoped, tag = 'scoped memory for tpu_custom_call.1']
    #allocation5 [shape = 'u8[4096]{0}', space=vmem, size = 0x1000, scoped, tag = 'input window, operand 1, single buffered']
    #allocation6 [shape = 's32[1]{0}', space=sflag, size = 0x4, scoped, tag = 'scoped memory for tpu_custom_call.1']
    #allocation7 [shape = 'u8[4096]{0}', space=vmem, size = 0x1000, scoped, tag = 'input window, operand 2, single buffered']
    #allocation8 [shape = 'u8[4096]{0}', space=vmem, size = 0x1000, scoped, tag = 'input window, operand 4, single buffered']
    #allocation9 [shape = 's32[1]{0}', space=sflag, size = 0x4, scoped, tag = 'scoped memory for tpu_custom_call.1']
    #allocation10 [shape = 'u8[65536]{0}', space=vmem, size = 0x10000, scoped, tag = 'input window, operand 5, single buffered']
    #allocation11 [shape = 'u8[8192]{0}', space=vmem, size = 0x2000, scoped, tag = 'output window, operand 0, single buffered']
    #allocation12 [shape = 'u8[8192]{0}', space=vmem, size = 0x2000, scoped, tag = 'output window, operand 1, single buffered']
    #allocation13 [shape = 's32[1]{0}', space=sflag, size = 0x4, scoped, tag = 'scoped memory for tpu_custom_call.1']
    #allocation14 [shape = 'u8[8192]{0}', space=vmem, size = 0x2000, scoped, tag = 'output window, operand 2, single buffered']
    #allocation15 [shape = 'u8[4096]{0}', space=vmem, size = 0x1000, scoped, tag = 'output window, operand 3, single buffered']
    #allocation16 [shape = 's32[1]{0}', space=sflag, size = 0x4, scoped, tag = 'scoped memory for tpu_custom_call.1']
    #allocation17 [shape = 'u8[4096]{0}', space=vmem, size = 0x1000, scoped, tag = 'output window, operand 4, single buffered']
    #allocation18 [shape = 'u8[4096]{0}', space=vmem, size = 0x1000, scoped, tag = 'output window, operand 5, single buffered']
    #allocation19 [shape = 's32[1]{0}', space=sflag, size = 0x4, scoped, tag = 'scoped memory for tpu_custom_call.1']
    %17 = vsyncpa [#allocation3], 0
    %18 = vsyncpa [#allocation6], 0
    %19 = vsyncpa [#allocation9], 0
    %20 = vsyncpa [#allocation4], 0
    %21 = vsyncpa [#allocation13], 0
    %22 = vsyncpa [#allocation16], 0
    %23 = vsyncpa [#allocation19], 0
    // Predicated region
    $region2: #{tpu_custom_call.1} parent=1 // pred_check
      _
    $region3: #{tpu_custom_call.1} parent=1 // pred_check_branch
      %25 = sbr.rel (0) target = $region5
    $region4: #{tpu_custom_call.1} parent=1 // pred_region
      %s27 = ssub.s32 128, 128
      %28 = vsyncadd [#allocation3], %s27
      %s30 = sshll.u32 [#allocation2], 4
      %s31 = int_to_ptr.vmem [resolvable:$true] %s30
      %33 = dma.hbm_to_vmem [thread:$0]  %s0, 128, %s31, [#allocation3]
    $region5: #{tpu_custom_call.1} parent=1 // pred_fallthru
      _
    // Predicated region
    $region6: #{tpu_custom_call.1} parent=1 // pred_check
      _
    $region7: #{tpu_custom_call.1} parent=1 // pred_check_branch
      %35 = sbr.rel (0) target = $region9
    $region8: #{tpu_custom_call.1} parent=1 // pred_region
      %s37 = ssub.s32 128, 128
      %38 = vsyncadd [#allocation6], %s37
      %s40 = sshll.u32 [#allocation5], 4
      %s41 = int_to_ptr.vmem [resolvable:$true] %s40
      %43 = dma.hbm_to_vmem [thread:$0]  %s1, 128, %s41, [#allocation6]
    $region9: #{tpu_custom_call.1} parent=1 // pred_fallthru
      _
    // Predicated region
    $region10: #{tpu_custom_call.1} parent=1 // pred_check
      _
    $region11: #{tpu_custom_call.1} parent=1 // pred_check_branch
      %45 = sbr.rel (0) target = $region13
    $region12: #{tpu_custom_call.1} parent=1 // pred_region
      %s47 = ssub.s32 128, 128
      %48 = vsyncadd [#allocation6], %s47
      %s50 = sshll.u32 [#allocation7], 4
      %s51 = int_to_ptr.vmem [resolvable:$true] %s50
      %53 = dma.hbm_to_vmem [thread:$0]  %s2, 128, %s51, [#allocation6]
    $region13: #{tpu_custom_call.1} parent=1 // pred_fallthru
      _
    // Predicated region
    $region14: #{tpu_custom_call.1} parent=1 // pred_check
      _
    $region15: #{tpu_custom_call.1} parent=1 // pred_check_branch
      %55 = sbr.rel (0) target = $region17
    $region16: #{tpu_custom_call.1} parent=1 // pred_region
      _
    $region17: #{tpu_custom_call.1} parent=1 // pred_fallthru
      _
    // Predicated region
    $region18: #{tpu_custom_call.1} parent=1 // pred_check
      _
    $region19: #{tpu_custom_call.1} parent=1 // pred_check_branch
      %57 = sbr.rel (0) target = $region21
    $region20: #{tpu_custom_call.1} parent=1 // pred_region
      %s59 = ssub.s32 128, 128
      %60 = vsyncadd [#allocation9], %s59
      %s62 = sshll.u32 [#allocation8], 4
      %s63 = int_to_ptr.vmem [resolvable:$true] %s62
      %65 = dma.hbm_to_vmem [thread:$0]  %s4, 128, %s63, [#allocation9]
    $region21: #{tpu_custom_call.1} parent=1 // pred_fallthru
      _
    // Predicated region
    $region22: #{tpu_custom_call.1} parent=1 // pred_check
      _
    $region23: #{tpu_custom_call.1} parent=1 // pred_check_branch
      %67 = sbr.rel (0) target = $region25
    $region24: #{tpu_custom_call.1} parent=1 // pred_region
      %s69 = ssub.s32 2048, 2048
      %70 = vsyncadd [#allocation9], %s69
      %s71 = sshll.u32 [#allocation10], 4
      %s72 = int_to_ptr.vmem [resolvable:$true] %s71
      %77 = dma.hbm_to_vmem [thread:$0]  %s5, 2048, %s72, [#allocation9], 128, 128, 8
    $region25: #{tpu_custom_call.1} parent=1 // pred_fallthru
      _
    // Predicated region
    $region26: #{tpu_custom_call.1} parent=1 // pred_check
      _
    $region27: #{tpu_custom_call.1} parent=1 // pred_check_branch
      %79 = sbr.rel (0) target = $region29
    $region28: #{tpu_custom_call.1} parent=1 // pred_region
      %80 = dma.done [#allocation3], 128
    $region29: #{tpu_custom_call.1} parent=1 // pred_fallthru
      _
    // Predicated region
    $region30: #{tpu_custom_call.1} parent=1 // pred_check
      _
    $region31: #{tpu_custom_call.1} parent=1 // pred_check_branch
      %82 = sbr.rel (0) target = $region33
    $region32: #{tpu_custom_call.1} parent=1 // pred_region
      %83 = dma.done [#allocation6], 128
    $region33: #{tpu_custom_call.1} parent=1 // pred_fallthru
      _
    // Predicated region
    $region34: #{tpu_custom_call.1} parent=1 // pred_check
      _
    $region35: #{tpu_custom_call.1} parent=1 // pred_check_branch
      %85 = sbr.rel (0) target = $region37
    $region36: #{tpu_custom_call.1} parent=1 // pred_region
      %86 = dma.done [#allocation6], 128
    $region37: #{tpu_custom_call.1} parent=1 // pred_fallthru
      _
    // Predicated region
    $region38: #{tpu_custom_call.1} parent=1 // pred_check
      _
    $region39: #{tpu_custom_call.1} parent=1 // pred_check_branch
      %88 = sbr.rel (0) target = $region41
    $region40: #{tpu_custom_call.1} parent=1 // pred_region
      %89 = dma.done [#allocation9], 128
    $region41: #{tpu_custom_call.1} parent=1 // pred_fallthru
      _
    // Predicated region
    $region42: #{tpu_custom_call.1} parent=1 // pred_check
      _
    $region43: #{tpu_custom_call.1} parent=1 // pred_check_branch
      %91 = sbr.rel (0) target = $region45
    $region44: #{tpu_custom_call.1} parent=1 // pred_region
      %92 = dma.done [#allocation9], 2048
    $region45: #{tpu_custom_call.1} parent=1 // pred_fallthru
      _
    %v93 = vld [vmem:[#allocation2] sm:$0xff]
    %v94 = vld [vmem:[#allocation5] sm:$0x1f]
    %v95 = vld [vmem:[#allocation7] sm:$0x1f]
    %v96 = vlaneseq
    %v97 = vshrl.u32 %v96, 7
    %v98 = vsub.s32 0, %v97
    %v99 = vrot.slane %v94, %v98
    %v100 = vmul.f32 %v93, %v99
    %v101 = vlaneseq
    %v102 = vshrl.u32 %v101, 7
    %v103 = vsub.s32 0, %v102
    %v104 = vrot.slane %v95, %v103
    %v105 = vadd.f32 %v100, %v104
    %v106 = vlaneseq
    %v107 = vshrl.u32 %v106, 7
    %v108 = vsub.s32 1, %v107
    %v109 = vrot.slane %v94, %v108
    %v110 = vmul.f32 %v93, %v109
    %v111 = vlaneseq
    %v112 = vshrl.u32 %v111, 7
    %v113 = vsub.s32 1, %v112
    %v114 = vrot.slane %v95, %v113
    %v115 = vadd.f32 %v110, %v114
    %v116 = vlaneseq
    %v117 = vshrl.u32 %v116, 7
    %v118 = vsub.s32 2, %v117
    %v119 = vrot.slane %v94, %v118
    %v120 = vmul.f32 %v93, %v119
    %v121 = vlaneseq
    %v122 = vshrl.u32 %v121, 7
    %v123 = vsub.s32 2, %v122
    %v124 = vrot.slane %v95, %v123
    %v125 = vadd.f32 %v120, %v124
    %v126 = vlaneseq
    %v127 = vshrl.u32 %v126, 7
    %v128 = vsub.s32 3, %v127
    %v129 = vrot.slane %v94, %v128
    %v130 = vmul.f32 %v93, %v129
    %v131 = vlaneseq
    %v132 = vshrl.u32 %v131, 7
    %v133 = vsub.s32 3, %v132
    %v134 = vrot.slane %v95, %v133
    %v135 = vadd.f32 %v130, %v134
    %v136 = vlaneseq
    %v137 = vshrl.u32 %v136, 7
    %v138 = vsub.s32 4, %v137
    %v139 = vrot.slane %v94, %v138
    %v140 = vmul.f32 %v93, %v139
    %v141 = vlaneseq
    %v142 = vshrl.u32 %v141, 7
    %v143 = vsub.s32 4, %v142
    %v144 = vrot.slane %v95, %v143
    %v145 = vadd.f32 %v140, %v144
    %146 = vst [vmem:[#allocation11] sm:$0xff] %v105
    %v147 = vld [vmem:[%s3] sm:$0xff]
    %vm148 = vcmask 523264
    %149 = vst.msk [vmem:[#allocation11 + $0x8] sm:$0xff] %vm148, %v147
    %150 = vst [vmem:[#allocation12] sm:$0xff] %v115
    %v151 = vld [vmem:[#allocation8] sm:$0xff]
    %152 = vst.msk [vmem:[#allocation12 + $0x8] sm:$0xff] %vm148, %v151
    %153 = vst [vmem:[#allocation14] sm:$0xff] %v125
    %v154 = vld [vmem:[%s3] sm:$0xff]
    %155 = vst.msk [vmem:[#allocation14 + $0x8] sm:$0xff] %vm148, %v154
    %156 = vst [vmem:[#allocation15] sm:$0xff] %v135
    %157 = vst [vmem:[#allocation17] sm:$0xff] %v145
    %v158 = vld [vmem:[#allocation10] sm:$0xff]
    %v159 = vld [vmem:[#allocation10 + $0x8] sm:$0xff]
    %v160 = vld [vmem:[#allocation10 + $0x10] sm:$0xff]
    %v161 = vld [vmem:[#allocation10 + $0x18] sm:$0xff]
    %v162 = vld [vmem:[#allocation10 + $0x20] sm:$0xff]
    %v163 = vld [vmem:[#allocation10 + $0x28] sm:$0xff]
    %v164 = vld [vmem:[#allocation10 + $0x30] sm:$0xff]
    %v165 = vld [vmem:[#allocation10 + $0x38] sm:$0xff]
    %v166 = vld [vmem:[#allocation10 + $0x40] sm:$0xff]
    %v167 = vld [vmem:[#allocation10 + $0x48] sm:$0xff]
    %v168 = vld [vmem:[#allocation10 + $0x50] sm:$0xff]
    %v169 = vld [vmem:[#allocation10 + $0x58] sm:$0xff]
    %v170 = vld [vmem:[#allocation10 + $0x60] sm:$0xff]
    %v171 = vld [vmem:[#allocation10 + $0x68] sm:$0xff]
    %v172 = vld [vmem:[#allocation10 + $0x70] sm:$0xff]
    %v173 = vld [vmem:[#allocation10 + $0x78] sm:$0xff]
    %174 = vmatprep.subr.mxu0 0.0
    %175 = vmatpush1.msra.mxu0 %v158
    %176 = vmatprep.subr.mxu0 0.0
    %177 = vmatpush1.msra.mxu0 %v159
    %178 = vmatprep.subr.mxu0 0.0
    %179 = vmatpush1.msra.mxu0 %v160
    %180 = vmatprep.subr.mxu0 0.0
    %181 = vmatpush1.msra.mxu0 %v161
    %182 = vmatprep.subr.mxu0 0.0
    %183 = vmatpush1.msra.mxu0 %v162
    %184 = vmatprep.subr.mxu0 0.0
    %185 = vmatpush1.msra.mxu0 %v163
    %186 = vmatprep.subr.mxu0 0.0
    %187 = vmatpush1.msra.mxu0 %v164
    %188 = vmatprep.subr.mxu0 0.0
    %189 = vmatpush1.msra.mxu0 %v165
    %190 = vmatprep.subr.mxu0 0.0
    %191 = vmatpush1.msra.mxu0 %v166
    %192 = vmatprep.subr.mxu0 0.0
    %193 = vmatpush1.msra.mxu0 %v167
    %194 = vmatprep.subr.mxu0 0.0
    %195 = vmatpush1.msra.mxu0 %v168
    %196 = vmatprep.subr.mxu0 0.0
    %197 = vmatpush1.msra.mxu0 %v169
    %198 = vmatprep.subr.mxu0 0.0
    %199 = vmatpush1.msra.mxu0 %v170
    %200 = vmatprep.subr.mxu0 0.0
    %201 = vmatpush1.msra.mxu0 %v171
    %202 = vmatprep.subr.mxu0 0.0
    %203 = vmatpush1.msra.mxu0 %v172
    %204 = vmatprep.subr.mxu0 0.0
    %205 = vmatpush1.msra.mxu0 %v173
    %206 = vmatprep.subr.mxu0 0.0
    %207 = vmatpush1.msra.mxu0 0.0
    %208 = vmatprep.subr.mxu0 0.0
    %209 = vmatpush1.msra.mxu0 0.0
    %210 = vmatprep.subr.mxu0 0.0
    %211 = vmatpush1.msra.mxu0 0.0
    %212 = vmatprep.subr.mxu0 0.0
    %213 = vmatpush1.msra.mxu0 0.0
    %214 = vmatprep.subr.mxu0 0.0
    %215 = vmatpush1.msra.mxu0 0.0
    %216 = vmatprep.subr.mxu0 0.0
    %217 = vmatpush1.msra.mxu0 0.0
    %218 = vmatprep.subr.mxu0 0.0
    %219 = vmatpush1.msra.mxu0 0.0
    %220 = vmatprep.subr.mxu0 0.0
    %221 = vmatpush1.msra.mxu0 0.0
    %222 = vmatprep.subr.mxu0 0.0
    %223 = vmatpush1.msra.mxu0 0.0
    %224 = vmatprep.subr.mxu0 0.0
    %225 = vmatpush1.msra.mxu0 0.0
    %226 = vmatprep.subr.mxu0 0.0
    %227 = vmatpush1.msra.mxu0 0.0
    %228 = vmatprep.subr.mxu0 0.0
    %229 = vmatpush1.msra.mxu0 0.0
    %230 = vmatprep.subr.mxu0 0.0
    %231 = vmatpush1.msra.mxu0 0.0
    %232 = vmatprep.subr.mxu0 0.0
    %233 = vmatpush1.msra.mxu0 0.0
    %234 = vmatprep.subr.mxu0 0.0
    %235 = vmatpush1.msra.mxu0 0.0
    %236 = vmatprep.subr.mxu0 0.0
    %237 = vmatpush1.msra.mxu0 0.0
    %238 = vmatprep.mubr.f32.mxu0 0.0
    %239 = vmatmul.mubr.f32.gmra.mrb[0].mxu0 %v145
    %v240 = vpop.f32.mrb[0].mxu0
    %v241 = vadd.f32 0.0, %v240
    %v242 = vpop.f32.mrb[0].mxu0
    %243 = vdwg.mxu0
    %244 = vst [vmem:[#allocation18] sm:$0xff] %v241
    // Predicated region
    $region46: #{tpu_custom_call.1} parent=1 // pred_check
      _
    $region47: #{tpu_custom_call.1} parent=1 // pred_check_branch
      %246 = sbr.rel (0) target = $region49
    $region48: #{tpu_custom_call.1} parent=1 // pred_region
      %s248 = ssub.s32 256, 256
      %249 = vsyncadd [#allocation4], %s248
      %s251 = sshll.u32 [#allocation11], 4
      %s252 = int_to_ptr.vmem [resolvable:$true] %s251
      %254 = dma.vmem_to_hbm [thread:$0]  %s252, 256, %s6, [#allocation4]
    $region49: #{tpu_custom_call.1} parent=1 // pred_fallthru
      _
    // Predicated region
    $region50: #{tpu_custom_call.1} parent=1 // pred_check
      _
    $region51: #{tpu_custom_call.1} parent=1 // pred_check_branch
      %256 = sbr.rel (0) target = $region53
    $region52: #{tpu_custom_call.1} parent=1 // pred_region
      %s258 = ssub.s32 256, 256
      %259 = vsyncadd [#allocation13], %s258
      %s261 = sshll.u32 [#allocation12], 4
      %s262 = int_to_ptr.vmem [resolvable:$true] %s261
      %264 = dma.vmem_to_hbm [thread:$0]  %s262, 256, %s7, [#allocation13]
    $region53: #{tpu_custom_call.1} parent=1 // pred_fallthru
      _
    // Predicated region
    $region54: #{tpu_custom_call.1} parent=1 // pred_check
      _
    $region55: #{tpu_custom_call.1} parent=1 // pred_check_branch
      %266 = sbr.rel (0) target = $region57
    $region56: #{tpu_custom_call.1} parent=1 // pred_region
      %s268 = ssub.s32 256, 256
      %269 = vsyncadd [#allocation13], %s268
      %s271 = sshll.u32 [#allocation14], 4
      %s272 = int_to_ptr.vmem [resolvable:$true] %s271
      %274 = dma.vmem_to_hbm [thread:$0]  %s272, 256, %s8, [#allocation13]
    $region57: #{tpu_custom_call.1} parent=1 // pred_fallthru
      _
    // Predicated region
    $region58: #{tpu_custom_call.1} parent=1 // pred_check
      _
    $region59: #{tpu_custom_call.1} parent=1 // pred_check_branch
      %276 = sbr.rel (0) target = $region61
    $region60: #{tpu_custom_call.1} parent=1 // pred_region
      %s278 = ssub.s32 128, 128
      %279 = vsyncadd [#allocation16], %s278
      %s281 = sshll.u32 [#allocation15], 4
      %s282 = int_to_ptr.vmem [resolvable:$true] %s281
      %284 = dma.vmem_to_hbm [thread:$0]  %s282, 128, %s9, [#allocation16]
    $region61: #{tpu_custom_call.1} parent=1 // pred_fallthru
      _
    // Predicated region
    $region62: #{tpu_custom_call.1} parent=1 // pred_check
      _
    $region63: #{tpu_custom_call.1} parent=1 // pred_check_branch
      %286 = sbr.rel (0) target = $region65
    $region64: #{tpu_custom_call.1} parent=1 // pred_region
      %s288 = ssub.s32 128, 128
      %289 = vsyncadd [#allocation16], %s288
      %s291 = sshll.u32 [#allocation17], 4
      %s292 = int_to_ptr.vmem [resolvable:$true] %s291
      %294 = dma.vmem_to_hbm [thread:$0]  %s292, 128, %s10, [#allocation16]
    $region65: #{tpu_custom_call.1} parent=1 // pred_fallthru
      _
    // Predicated region
    $region66: #{tpu_custom_call.1} parent=1 // pred_check
      _
    $region67: #{tpu_custom_call.1} parent=1 // pred_check_branch
      %296 = sbr.rel (0) target = $region69
    $region68: #{tpu_custom_call.1} parent=1 // pred_region
      %s298 = ssub.s32 128, 128
      %299 = vsyncadd [#allocation19], %s298
      %s301 = sshll.u32 [#allocation18], 4
      %s302 = int_to_ptr.vmem [resolvable:$true] %s301
      %304 = dma.vmem_to_hbm [thread:$0]  %s302, 128, %s11, [#allocation19]
    $region69: #{tpu_custom_call.1} parent=1 // pred_fallthru
      _
    // Predicated region
    $region70: #{tpu_custom_call.1} parent=1 // pred_check
      _
    $region71: #{tpu_custom_call.1} parent=1 // pred_check_branch
      %306 = sbr.rel (0) target = $region73
    $region72: #{tpu_custom_call.1} parent=1 // pred_region
      %307 = dma.done [#allocation4], 256
    $region73: #{tpu_custom_call.1} parent=1 // pred_fallthru
      _
    // Predicated region
    $region74: #{tpu_custom_call.1} parent=1 // pred_check
      _
    $region75: #{tpu_custom_call.1} parent=1 // pred_check_branch
      %309 = sbr.rel (0) target = $region77
    $region76: #{tpu_custom_call.1} parent=1 // pred_region
      %310 = dma.done [#allocation13], 256
    $region77: #{tpu_custom_call.1} parent=1 // pred_fallthru
      _
    // Predicated region
    $region78: #{tpu_custom_call.1} parent=1 // pred_check
      _
    $region79: #{tpu_custom_call.1} parent=1 // pred_check_branch
      %312 = sbr.rel (0) target = $region81
    $region80: #{tpu_custom_call.1} parent=1 // pred_region
      %313 = dma.done [#allocation13], 256
    $region81: #{tpu_custom_call.1} parent=1 // pred_fallthru
      _
    // Predicated region
    $region82: #{tpu_custom_call.1} parent=1 // pred_check
      _
    $region83: #{tpu_custom_call.1} parent=1 // pred_check_branch
      %315 = sbr.rel (0) target = $region85
    $region84: #{tpu_custom_call.1} parent=1 // pred_region
      %316 = dma.done [#allocation16], 128
    $region85: #{tpu_custom_call.1} parent=1 // pred_fallthru
      _
    // Predicated region
    $region86: #{tpu_custom_call.1} parent=1 // pred_check
      _
    $region87: #{tpu_custom_call.1} parent=1 // pred_check_branch
      %318 = sbr.rel (0) target = $region89
    $region88: #{tpu_custom_call.1} parent=1 // pred_region
      %319 = dma.done [#allocation16], 128
    $region89: #{tpu_custom_call.1} parent=1 // pred_fallthru
      _
    // Predicated region
    $region90: #{tpu_custom_call.1} parent=1 // pred_check
      _
    $region91: #{tpu_custom_call.1} parent=1 // pred_check_branch
      %321 = sbr.rel (0) target = $region93
    $region92: #{tpu_custom_call.1} parent=1 // pred_region
      %322 = dma.done [#allocation19], 128
    $region93: #{tpu_custom_call.1} parent=1 // pred_fallthru
      _
    %323 = vsyncpa [#allocation3], 1
    %324 = vsyncpa [#allocation6], 1
    %325 = vsyncpa [#allocation9], 1
    %326 = vsyncpa [#allocation4], 1
    %327 = vsyncpa [#allocation13], 1
    %328 = vsyncpa [#allocation16], 1
    %329 = vsyncpa [#allocation19], 1

</llo_original>
